<compile_context>
chip_gen: v6e
topology: v6e:2x2x1
jax: 0.10.0
libtpu: 0.0.40
codegen_flags: <defaults>
</compile_context>

<pallas_src>
import functools

import jax
import jax.numpy as jnp
from jax import lax
from jax.experimental import pallas as pl
from jax.experimental.pallas import tpu as pltpu


def _neg_score_kernel(gamma, hr_ref, ntails_ref, out_ref):
    """One (B-tile, N-tile) grid step of the negative-tail TransE scores.

    Ref shapes:
      hr_ref     : (tb, 1, D)  float32     (heads_r[:, 0, :] + relation emb)
      ntails_ref : (tb, tn, D) native dtype (seq-pos-0 fused via BlockSpec)
      out_ref    : (tb, 1, tn) float32     (gamma - ||hr - t_n||_2)
    """
    hr = hr_ref[...]                                    # (tb, 1, D) f32
    nt = ntails_ref[...]                                # (tb, tn, D) native

    # MXU: cross term  hr . t_n   (batch b, contract D) -> (tb, 1, tn)
    cross = lax.dot_general(
        hr.astype(nt.dtype), nt,
        dimension_numbers=(((2,), (2,)), ((0,), (0,))),
        preferred_element_type=jnp.float32)

    # MXU: ||t_n||^2 = ones . t_n^2  (square kept in f32 for accuracy)
    sq = nt.astype(jnp.float32)
    sq = sq * sq                                        # (tb, tn, D) f32
    tnorm2 = lax.dot_general(
        jnp.ones_like(hr), sq,
        dimension_numbers=(((2,), (2,)), ((0,), (0,))),
        preferred_element_type=jnp.float32)             # (tb, 1, tn)

    # ||hr||^2 : O(tb*D), negligible per step.
    hnorm2 = jnp.sum(hr * hr, axis=-1, keepdims=True)   # (tb, 1, 1)

    d2 = hnorm2 - 2.0 * cross + tnorm2                  # (tb, 1, tn)
    out_ref[...] = gamma - jnp.sqrt(jnp.maximum(d2, 0.0))


def _generation_budgets():
    """(streaming working-set budget, vmem_limit cap) per TPU generation."""
    try:
        vmem_phys = pltpu.get_tpu_info().vmem_capacity_bytes
    except Exception:  # conservative (v7x-sized) default if the query fails
        vmem_phys = 64 * 1024 * 1024
    if vmem_phys >= 100 * 1024 * 1024:      # v5e / v6e: 128 MiB physical VMEM
        return 56 * 1024 * 1024, 96 * 1024 * 1024
    # v7x: 64 MiB per TensorCore -- blocks still >= a few MiB, but headroom kept.
    return 28 * 1024 * 1024, 48 * 1024 * 1024


def _choose_tiles(B, N, D, itemsize):
    """Pick (tb, tn, padded_N, vmem_cap).

    Per-element working-set cost counts the double-buffered native block plus
    the f32 intermediates (cast + square) of the ||t||^2 path.
    """
    workset_budget, vmem_cap = _generation_budgets()
    per_elem = 2 * itemsize + (8 if itemsize < 4 else 4)

    # B tile: amortize per-step overhead / raise the batched-matmul batch, but
    # keep >= 2 steps along B when possible (v7x megacore on the B axis).
    tb = B
    for cand in (64, 32, 16, 8):
        if B % cand == 0:
            tb = cand
            break
    while tb > 8 and B // tb < 2:
        tb //= 2

    def fits(c):
        return tb * c * D * per_elem <= workset_budget

    candidates = (2048, 1024, 512, 256, 128)
    if N % 128 == 0:
        tn = 128
        for cand in candidates:
            if N % cand == 0 and fits(cand):
                tn = cand
                break
        pad_to = None
    elif fits(N):
        # Small irregular N (e.g. tiny test shapes): one full-N tile; the
        # lane-masked store is negligible at this size.
        tn, pad_to = N, None
    else:
        # Large irregular N: pad up to a multiple of the tile so the stream
        # stays VMEM-bounded and stores stay lane-dense.
        tn = 128
        for cand in candidates:
            if fits(cand):
                tn = cand
                break
        pad_to = ((N + tn - 1) // tn) * tn
    return tb, tn, pad_to, vmem_cap


class RobertaKnowledgeEmbeddingHeadPallas:
    """JAX/Pallas port of the TransE knowledge-embedding head."""

    def __init__(self, hidden_dim, nrelation, gamma, seed=0):
        self.hidden_dim = hidden_dim
        self.nrelation = nrelation
        self.gamma = float(gamma)
        self.eps = 2.0
        self.emb_range = (self.gamma + self.eps) / self.hidden_dim
        # TODO(synk): init does not bit-match PyTorch's RNG; load real weights
        # for checkpoint parity.
        key = jax.random.PRNGKey(seed)
        self.relation_emb = jax.random.uniform(
            key, (nrelation, hidden_dim), dtype=jnp.float32,
            minval=-self.emb_range, maxval=self.emb_range)

    def _transe(self, h, r, t):
        s = h + r - t
        return self.gamma - jnp.sqrt(jnp.sum(s * s, axis=-1, keepdims=True))

    def __call__(self, heads, tails, nHeads, nTails, heads_r, tails_r,
                 relations, relation_desc_emb=None):
        B, T, _ = heads.shape
        D = self.hidden_dim
        N = nTails.shape[-1] // D

        # ---- tiny O(B*D) glue + pScores: plain JAX (hoisted out of kernel) --
        heads0 = heads[:, 0, :].astype(jnp.float32)
        tails0 = tails[:, 0, :].astype(jnp.float32)
        heads_r0 = heads_r[:, 0, :].astype(jnp.float32)
        tails_r0 = tails_r[:, 0, :].astype(jnp.float32)
        del nHeads  # nHScores is dropped by the module (USE_NHEADS == False)

        if relation_desc_emb is not None:
            rel = relation_desc_emb[:, 0, :].astype(jnp.float32)
        else:
            rel = jnp.take(self.relation_emb, relations, axis=0)      # (B, D)

        pScores = 0.5 * (self._transe(heads_r0, rel, tails0)
                         + self._transe(heads0, rel, tails_r0))        # (B, 1)

        hr = (heads_r0 + rel)[:, None, :]                              # (B, 1, D)

        # ---- dominant (B, N, D) negatives stream: Pallas kernel -------------
        # (B, T, N*D) -> (B, T, N, D) is metadata-only; the seq-pos-0 selection
        # is fused into the BlockSpec (T axis squeezed at block index 0).
        nTails4 = nTails.reshape(B, T, N, D)
        itemsize = jnp.dtype(nTails4.dtype).itemsize
        tb, tn, pad_to, vmem_cap = _choose_tiles(B, N, D, itemsize)

        if pad_to is not None:
            # Large non-128-aligned N: pad the seq-pos-0 slice up to the tile.
            # TODO(synk): could avoid this HBM copy with a cdiv grid + masked
            # edge tile; padding keeps every output store lane-dense instead.
            nT0 = jnp.pad(nTails4[:, 0], ((0, 0), (0, pad_to - N), (0, 0)))
            nTails4 = nT0[:, None]                                     # (B,1,Np,D)
            n_eff = pad_to
        else:
            n_eff = N

        grid = (B // tb, n_eff // tn)

        in_specs = [
            pl.BlockSpec((tb, 1, D), lambda i, j: (i, 0, 0)),          # hr
            pl.BlockSpec((tb, pl.Squeezed(), tn, D),
                         lambda i, j: (i, 0, j, 0)),                   # nTails
        ]
        out_specs = pl.BlockSpec((tb, 1, tn), lambda i, j: (i, 0, j))  # scores

        # VMEM budget handed to Mosaic: double-buffered blocks plus the
        # in-kernel f32 intermediates of the ||t||^2 path.
        per_elem = 2 * itemsize + (8 if itemsize < 4 else 4)
        est = tb * tn * D * per_elem          # negatives block + f32 temps
        est += 2 * (tb * D * 4)               # hr (double buffered)
        est += 2 * (tb * tn * 4)              # output block (double buffered)
        vmem_limit = int(min(vmem_cap, max(2 * est, 16 * 1024 * 1024)))

        kernel = functools.partial(_neg_score_kernel, self.gamma)
        nScores3 = pl.pallas_call(
            kernel,
            out_shape=jax.ShapeDtypeStruct((B, 1, n_eff), jnp.float32),
            grid_spec=pltpu.PrefetchScalarGridSpec(
                num_scalar_prefetch=0,
                grid=grid,
                in_specs=in_specs,
                out_specs=out_specs,
            ),
            compiler_params=pltpu.CompilerParams(
                dimension_semantics=("parallel", "parallel"),
                vmem_limit_bytes=vmem_limit,
            ),
        )(hr, nTails4)

        nScores = nScores3.reshape(B, n_eff)[:, :N]
        return pScores, nScores


def _reference(module, heads, tails, nTails, heads_r, tails_r, relations):
    """Pure-JAX reference (direct subtract-square-norm form)."""
    B, D = heads.shape[0], module.hidden_dim
    g = module.gamma
    h = heads[:, 0, :].astype(jnp.float32)
    t = tails[:, 0, :].astype(jnp.float32)
    hr = heads_r[:, 0, :].astype(jnp.float32)
    tr = tails_r[:, 0, :].astype(jnp.float32)
    nT = nTails[:, 0, :].reshape(B, -1, D).astype(jnp.float32)
    r = jnp.take(module.relation_emb, relations, axis=0)

    def transe(a, rel, b):
        s = a + rel - b
        return g - jnp.linalg.norm(s, axis=-1)

    p = 0.5 * (transe(hr, r, t) + transe(h, r, tr))
    n = transe((hr + r)[:, None, :], 0.0, nT)
    return p[:, None], n


if __name__ == "__main__":
    B, T, D, N = 2, 8, 32, 4
    nrelation = 5
    gamma = 6.0

    key = jax.random.PRNGKey(0)
    ks = jax.random.split(key, 7)
    heads = jax.random.normal(ks[0], (B, T, D), dtype=jnp.float32)
    tails = jax.random.normal(ks[1], (B, T, D), dtype=jnp.float32)
    heads_r = jax.random.normal(ks[2], (B, T, D), dtype=jnp.float32)
    tails_r = jax.random.normal(ks[3], (B, T, D), dtype=jnp.float32)
    nHeads = jax.random.normal(ks[4], (B, T, N * D), dtype=jnp.float32)
    nTails = jax.random.normal(ks[5], (B, T, N * D), dtype=jnp.float32)
    relations = jax.random.randint(ks[6], (B,), 0, nrelation, dtype=jnp.int32)

    module = RobertaKnowledgeEmbeddingHeadPallas(
        hidden_dim=D, nrelation=nrelation, gamma=gamma, seed=0)

    pScores, nScores = module(heads, tails, nHeads, nTails,
                              heads_r, tails_r, relations)
    jax.block_until_ready((pScores, nScores))

    p_ref, n_ref = _reference(module, heads, tails, nTails,
                              heads_r, tails_r, relations)
    assert pScores.shape == (B, 1) and nScores.shape == (B, N)
    assert jnp.allclose(pScores, p_ref, atol=1e-4, rtol=1e-4)
    assert jnp.allclose(nScores, n_ref, atol=1e-4, rtol=1e-4)

    print("KERNEL_OK")
</pallas_src>

<mosaic_0001>
module attributes {stable_mosaic.version = 11 : i64} {
  func.func @_neg_score_kernel(%arg0: i32, %arg1: i32, %arg2: memref<2x1x32xf32, #tpu.memory_space<vmem>>, %arg3: memref<2x1x4x32xf32, #tpu.memory_space<vmem>>, %arg4: memref<2x1x4xf32, #tpu.memory_space<vmem>>) attributes {dimension_semantics = [#tpu.dimension_semantics<parallel>, #tpu.dimension_semantics<parallel>], iteration_bounds = array<i64: 1, 1>, scalar_prefetch = 0 : i64, scratch_operands = 0 : i64, tpu.core_type = #tpu.core_type<tc>, window_params = [{transform_indices = @transform_0, window_bounds = array<i64: 2, 1, 32>}, {transform_indices = @transform_1, window_bounds = array<i64: 2, 1, 4, 32>}, {transform_indices = @transform_2, window_bounds = array<i64: 2, 1, 4>}]} {
    %c0 = arith.constant 0 : index
    %c0_0 = arith.constant 0 : index
    %c0_1 = arith.constant 0 : index
    %0 = vector.load %arg2[%c0, %c0_0, %c0_1] : memref<2x1x32xf32, #tpu.memory_space<vmem>>, vector<2x1x32xf32>
    %c0_2 = arith.constant 0 : index
    %c0_3 = arith.constant 0 : index
    %c0_4 = arith.constant 0 : index
    %c0_5 = arith.constant 0 : index
    %1 = vector.load %arg3[%c0_2, %c0_3, %c0_4, %c0_5] : memref<2x1x4x32xf32, #tpu.memory_space<vmem>>, vector<2x1x4x32xf32>
    %2 = vector.shape_cast %1 : vector<2x1x4x32xf32> to vector<2x4x32xf32>
    %cst = arith.constant dense<0.000000e+00> : vector<2x1x4xf32>
    %3 = tpu.matmul %0, %2, %cst {dimension_numbers = #tpu.dot_dimension_numbers<[2], [2], [1], [1], [0, 0, 0, 1, 1, 1], [0], [0]>} : vector<2x1x32xf32>, vector<2x4x32xf32>, vector<2x1x4xf32> -> vector<2x1x4xf32>
    %4 = arith.mulf %2, %2 : vector<2x4x32xf32>
    %cst_6 = arith.constant 1.000000e+00 : f32
    %5 = vector.broadcast %cst_6 : f32 to vector<2x1x32xf32>
    %cst_7 = arith.constant dense<0.000000e+00> : vector<2x1x4xf32>
    %6 = tpu.matmul %5, %4, %cst_7 {dimension_numbers = #tpu.dot_dimension_numbers<[2], [2], [1], [1], [0, 0, 0, 1, 1, 1], [0], [0]>} : vector<2x1x32xf32>, vector<2x4x32xf32>, vector<2x1x4xf32> -> vector<2x1x4xf32>
    %7 = arith.mulf %0, %0 : vector<2x1x32xf32>
    %cst_8 = arith.constant dense<0.000000e+00> : vector<2x1xf32>
    %8 = vector.multi_reduction <add>, %7, %cst_8 [2] : vector<2x1x32xf32> to vector<2x1xf32>
    %9 = vector.shape_cast %8 : vector<2x1xf32> to vector<2x1x1xf32>
    %cst_9 = arith.constant 2.000000e+00 : f32
    %10 = vector.broadcast %cst_9 : f32 to vector<2x1x4xf32>
    %11 = arith.mulf %10, %3 : vector<2x1x4xf32>
    %12 = vector.broadcast %9 : vector<2x1x1xf32> to vector<2x1x4xf32>
    %13 = arith.subf %12, %11 : vector<2x1x4xf32>
    %14 = arith.addf %13, %6 : vector<2x1x4xf32>
    %cst_10 = arith.constant 0.000000e+00 : f32
    %15 = vector.broadcast %cst_10 : f32 to vector<2x1x4xf32>
    %16 = arith.maximumf %14, %15 : vector<2x1x4xf32>
    %17 = math.sqrt %16 : vector<2x1x4xf32>
    %cst_11 = arith.constant 6.000000e+00 : f32
    %18 = vector.broadcast %cst_11 : f32 to vector<2x1x4xf32>
    %19 = arith.subf %18, %17 : vector<2x1x4xf32>
    %c0_12 = arith.constant 0 : index
    %c0_13 = arith.constant 0 : index
    %c0_14 = arith.constant 0 : index
    %20 = vector.load %arg4[%c0_12, %c0_13, %c0_14] : memref<2x1x4xf32, #tpu.memory_space<vmem>>, vector<2x1x4xf32>
    tpu.vector_store %arg4[%c0_12, %c0_13, %c0_14], %19 {strides = array<i32>} : memref<2x1x4xf32, #tpu.memory_space<vmem>>, vector<2x1x4xf32>,
    return
  }
  func.func @transform_0(%arg0: i32, %arg1: i32) -> (i32, i32, i32) {
    %c0_i32 = arith.constant 0 : i32
    %c0_i32_0 = arith.constant 0 : i32
    %c0_i32_1 = arith.constant 0 : i32
    return %arg0, %c0_i32, %c0_i32_0 : i32, i32, i32
  }
  func.func @transform_1(%arg0: i32, %arg1: i32) -> (i32, i32, i32, i32) {
    %c0_i32 = arith.constant 0 : i32
    %c0_i32_0 = arith.constant 0 : i32
    %c0_i32_1 = arith.constant 0 : i32
    return %arg0, %c0_i32, %arg1, %c0_i32_0 : i32, i32, i32, i32
  }
  func.func @transform_2(%arg0: i32, %arg1: i32) -> (i32, i32, i32) {
    %c0_i32 = arith.constant 0 : i32
    %c0_i32_0 = arith.constant 0 : i32
    return %arg0, %c0_i32, %arg1 : i32, i32, i32
  }
}

</mosaic_0001>

<llo_original>
// kernel: tpu_custom_call.1
$region0: #{tpu_custom_call.1}
  #allocation0 [shape = 'u32[]', space=smem, size = 0x4, offset = 0x4, fixed_abs, tag = 'smem constant byte address 0x4 - core index']
  #allocation1 [shape = 'u32[144,128]{1,0:T(1,128)}', space=vmem, size = 0x12000, scoped, tag = 'internal scratch']
  %s0 = inlined_call_operand.hbm [shape: f32[2,1,32], index: 0, kind: input, shape index: {}]
  %s1 = inlined_call_operand.hbm [shape: f32[2,8,4,32], index: 1, kind: input, shape index: {}]
  %s2 = inlined_call_operand.hbm [shape: f32[2,1,4], index: 2, kind: output, shape index: {}]
  %s3 = sld [smem:[#allocation0]]
  $region26: #{tpu_custom_call.1} parent=0
    _
  %s5 = ssub.s32 1, %s3
  %s6 = scalar_select 0, %s5, %s3
  $region1: #{tpu_custom_call.1} parent=0
    #allocation2 [shape = 'u8[1024]{0}', space=vmem, size = 0x400, scoped, tag = 'input window, operand 0, single buffered']
    #allocation3 [shape = 's32[1]{0}', space=sflag, size = 0x4, scoped, tag = 'scoped memory for tpu_custom_call.1']
    #allocation4 [shape = 's32[1]{0}', space=sflag, size = 0x4, scoped, tag = 'scoped memory for tpu_custom_call.1']
    #allocation5 [shape = 'u8[4096]{0}', space=vmem, size = 0x1000, scoped, tag = 'input window, operand 1, single buffered']
    #allocation6 [shape = 's32[1]{0}', space=sflag, size = 0x4, scoped, tag = 'scoped memory for tpu_custom_call.1']
    #allocation7 [shape = 'u8[1024]{0}', space=vmem, size = 0x400, scoped, tag = 'output window, operand 0, single buffered']
    %7 = vsyncpa [#allocation3], 0
    %8 = vsyncpa [#allocation6], 0
    %9 = vsyncpa [#allocation4], 0
    // Predicated region
    $region2: #{tpu_custom_call.1} parent=1 // pred_check
      _
    $region3: #{tpu_custom_call.1} parent=1 // pred_check_branch
      %11 = sbr.rel (0) target = $region5
    $region4: #{tpu_custom_call.1} parent=1 // pred_region
      %s13 = ssub.s32 32, 32
      %14 = vsyncadd [#allocation3], %s13
      %s15 = sshll.u32 [#allocation2], 4
      %s16 = int_to_ptr.vmem [resolvable:$true] %s15
      %21 = dma.hbm_to_vmem [thread:$0]  %s0, 32, %s16, [#allocation3], 16, 16, 1
    $region5: #{tpu_custom_call.1} parent=1 // pred_fallthru
      _
    // Predicated region
    $region6: #{tpu_custom_call.1} parent=1 // pred_check
      _
    $region7: #{tpu_custom_call.1} parent=1 // pred_check_branch
      %23 = sbr.rel (0) target = $region9
    $region8: #{tpu_custom_call.1} parent=1 // pred_region
      %s25 = ssub.s32 128, 128
      %26 = vsyncadd [#allocation6], %s25
      %s27 = sshll.u32 [#allocation5], 4
      %s28 = int_to_ptr.vmem [resolvable:$true] %s27
      %33 = dma.hbm_to_vmem [thread:$0]  %s1, 128, %s28, [#allocation6], 512, 64, 4
    $region9: #{tpu_custom_call.1} parent=1 // pred_fallthru
      _
    // Predicated region
    $region10: #{tpu_custom_call.1} parent=1 // pred_check
      _
    $region11: #{tpu_custom_call.1} parent=1 // pred_check_branch
      %35 = sbr.rel (0) target = $region13
    $region12: #{tpu_custom_call.1} parent=1 // pred_region
      %36 = dma.done [#allocation3], 32
    $region13: #{tpu_custom_call.1} parent=1 // pred_fallthru
      _
    // Predicated region
    $region14: #{tpu_custom_call.1} parent=1 // pred_check
      _
    $region15: #{tpu_custom_call.1} parent=1 // pred_check_branch
      %38 = sbr.rel (0) target = $region17
    $region16: #{tpu_custom_call.1} parent=1 // pred_region
      %39 = dma.done [#allocation6], 128
    $region17: #{tpu_custom_call.1} parent=1 // pred_fallthru
      _
    %v40 = vld [vmem:[#allocation2] sm:$0x1]
    %v41 = vld [vmem:[#allocation2 + $0x1] sm:$0x1]
    %v42 = vld [vmem:[#allocation5] sm:$0xf]
    %v43 = vld [vmem:[#allocation5 + $0x4] sm:$0xf]
    %vm44 = vcmask 261120
    %v46 = vsel %vm44, %v40, 0
    %v49 = vsel %vm44, %v42, 0
    %51 = vmatprep.subr.mxu0 0.0
    %52 = vmatpush1.xpose.msra.mxu0 0.0
    %53 = vmatprep.subr.mxu0 0.0
    %54 = vmatpush1.xpose.msra.mxu0 0.0
    %55 = vmatprep.subr.mxu0 0.0
    %56 = vmatpush1.xpose.msra.mxu0 0.0
    %57 = vmatprep.subr.mxu0 0.0
    %58 = vmatpush1.xpose.msra.mxu0 0.0
    %59 = vmatprep.subr.mxu0 0.0
    %60 = vmatpush1.xpose.msra.mxu0 0.0
    %61 = vmatprep.subr.mxu0 0.0
    %62 = vmatpush1.xpose.msra.mxu0 0.0
    %63 = vmatprep.subr.mxu0 0.0
    %64 = vmatpush1.xpose.msra.mxu0 0.0
    %65 = vmatprep.subr.mxu0 0.0
    %66 = vmatpush1.xpose.msra.mxu0 0.0
    %67 = vmatprep.subr.mxu0 0.0
    %68 = vmatpush1.xpose.msra.mxu0 0.0
    %69 = vmatprep.subr.mxu0 0.0
    %70 = vmatpush1.xpose.msra.mxu0 0.0
    %71 = vmatprep.subr.mxu0 0.0
    %72 = vmatpush1.xpose.msra.mxu0 0.0
    %73 = vmatprep.subr.mxu0 0.0
    %74 = vmatpush1.xpose.msra.mxu0 0.0
    %75 = vmatprep.subr.mxu0 0.0
    %76 = vmatpush1.xpose.msra.mxu0 0.0
    %77 = vmatprep.subr.mxu0 0.0
    %78 = vmatpush1.xpose.msra.mxu0 0.0
    %79 = vmatprep.subr.mxu0 0.0
    %80 = vmatpush1.xpose.msra.mxu0 0.0
    %81 = vmatprep.subr.mxu0 0.0
    %82 = vmatpush1.xpose.msra.mxu0 %v49
    %83 = vmatprep.subr.mxu0 0.0
    %84 = vmatpush2.xpose.msra.mxu0 0.0
    %85 = vmatprep.subr.mxu0 0.0
    %86 = vmatpush2.xpose.msra.mxu0 0.0
    %87 = vmatprep.subr.mxu0 0.0
    %88 = vmatpush2.xpose.msra.mxu0 0.0
    %89 = vmatprep.subr.mxu0 0.0
    %90 = vmatpush2.xpose.msra.mxu0 0.0
    %91 = vmatprep.subr.mxu0 0.0
    %92 = vmatpush2.xpose.msra.mxu0 0.0
    %93 = vmatprep.subr.mxu0 0.0
    %94 = vmatpush2.xpose.msra.mxu0 0.0
    %95 = vmatprep.subr.mxu0 0.0
    %96 = vmatpush2.xpose.msra.mxu0 0.0
    %97 = vmatprep.subr.mxu0 0.0
    %98 = vmatpush2.xpose.msra.mxu0 0.0
    %99 = vmatprep.subr.mxu0 0.0
    %100 = vmatpush2.xpose.msra.mxu0 0.0
    %101 = vmatprep.subr.mxu0 0.0
    %102 = vmatpush2.xpose.msra.mxu0 0.0
    %103 = vmatprep.subr.mxu0 0.0
    %104 = vmatpush2.xpose.msra.mxu0 0.0
    %105 = vmatprep.subr.mxu0 0.0
    %106 = vmatpush2.xpose.msra.mxu0 0.0
    %107 = vmatprep.subr.mxu0 0.0
    %108 = vmatpush2.xpose.msra.mxu0 0.0
    %109 = vmatprep.subr.mxu0 0.0
    %110 = vmatpush2.xpose.msra.mxu0 0.0
    %111 = vmatprep.subr.mxu0 0.0
    %112 = vmatpush2.xpose.msra.mxu0 0.0
    %113 = vmatprep.subr.mxu0 0.0
    %114 = vmatpush2.xpose.msra.mxu0 0.0
    %115 = vmatprep.mubr.f32.mxu0 0.0
    %116 = vmatmul.mubr.f32.gmra.mxu0 %v46
    %v117 = vpop.f32.mrf.mxu0
    %v118 = vadd.f32 0.0, %v117
    %v119 = vpop.f32.mrf.mxu0
    %120 = vdwg.mxu0
    %v122 = vsel %vm44, %v41, 0
    %v125 = vsel %vm44, %v43, 0
    %127 = vmatprep.subr.mxu0 0.0
    %128 = vmatpush1.xpose.msra.mxu0 0.0
    %129 = vmatprep.subr.mxu0 0.0
    %130 = vmatpush1.xpose.msra.mxu0 0.0
    %131 = vmatprep.subr.mxu0 0.0
    %132 = vmatpush1.xpose.msra.mxu0 0.0
    %133 = vmatprep.subr.mxu0 0.0
    %134 = vmatpush1.xpose.msra.mxu0 0.0
    %135 = vmatprep.subr.mxu0 0.0
    %136 = vmatpush1.xpose.msra.mxu0 0.0
    %137 = vmatprep.subr.mxu0 0.0
    %138 = vmatpush1.xpose.msra.mxu0 0.0
    %139 = vmatprep.subr.mxu0 0.0
    %140 = vmatpush1.xpose.msra.mxu0 0.0
    %141 = vmatprep.subr.mxu0 0.0
    %142 = vmatpush1.xpose.msra.mxu0 0.0
    %143 = vmatprep.subr.mxu0 0.0
    %144 = vmatpush1.xpose.msra.mxu0 0.0
    %145 = vmatprep.subr.mxu0 0.0
    %146 = vmatpush1.xpose.msra.mxu0 0.0
    %147 = vmatprep.subr.mxu0 0.0
    %148 = vmatpush1.xpose.msra.mxu0 0.0
    %149 = vmatprep.subr.mxu0 0.0
    %150 = vmatpush1.xpose.msra.mxu0 0.0
    %151 = vmatprep.subr.mxu0 0.0
    %152 = vmatpush1.xpose.msra.mxu0 0.0
    %153 = vmatprep.subr.mxu0 0.0
    %154 = vmatpush1.xpose.msra.mxu0 0.0
    %155 = vmatprep.subr.mxu0 0.0
    %156 = vmatpush1.xpose.msra.mxu0 0.0
    %157 = vmatprep.subr.mxu0 0.0
    %158 = vmatpush1.xpose.msra.mxu0 %v125
    %159 = vmatprep.subr.mxu0 0.0
    %160 = vmatpush2.xpose.msra.mxu0 0.0
    %161 = vmatprep.subr.mxu0 0.0
    %162 = vmatpush2.xpose.msra.mxu0 0.0
    %163 = vmatprep.subr.mxu0 0.0
    %164 = vmatpush2.xpose.msra.mxu0 0.0
    %165 = vmatprep.subr.mxu0 0.0
    %166 = vmatpush2.xpose.msra.mxu0 0.0
    %167 = vmatprep.subr.mxu0 0.0
    %168 = vmatpush2.xpose.msra.mxu0 0.0
    %169 = vmatprep.subr.mxu0 0.0
    %170 = vmatpush2.xpose.msra.mxu0 0.0
    %171 = vmatprep.subr.mxu0 0.0
    %172 = vmatpush2.xpose.msra.mxu0 0.0
    %173 = vmatprep.subr.mxu0 0.0
    %174 = vmatpush2.xpose.msra.mxu0 0.0
    %175 = vmatprep.subr.mxu0 0.0
    %176 = vmatpush2.xpose.msra.mxu0 0.0
    %177 = vmatprep.subr.mxu0 0.0
    %178 = vmatpush2.xpose.msra.mxu0 0.0
    %179 = vmatprep.subr.mxu0 0.0
    %180 = vmatpush2.xpose.msra.mxu0 0.0
    %181 = vmatprep.subr.mxu0 0.0
    %182 = vmatpush2.xpose.msra.mxu0 0.0
    %183 = vmatprep.subr.mxu0 0.0
    %184 = vmatpush2.xpose.msra.mxu0 0.0
    %185 = vmatprep.subr.mxu0 0.0
    %186 = vmatpush2.xpose.msra.mxu0 0.0
    %187 = vmatprep.subr.mxu0 0.0
    %188 = vmatpush2.xpose.msra.mxu0 0.0
    %189 = vmatprep.subr.mxu0 0.0
    %190 = vmatpush2.xpose.msra.mxu0 0.0
    %191 = vmatprep.mubr.f32.mxu0 0.0
    %192 = vmatmul.mubr.f32.gmra.mxu0 %v122
    %v193 = vpop.f32.mrf.mxu0
    %v194 = vadd.f32 0.0, %v193
    %v195 = vpop.f32.mrf.mxu0
    %196 = vdwg.mxu0
    %v197 = vmul.f32 %v42, %v42
    %v198 = vmul.f32 %v43, %v43
    %v200 = vsel %vm44, 1.0, 0
    %v203 = vsel %vm44, %v197, 0
    %205 = vmatprep.subr.mxu0 0.0
    %206 = vmatpush1.xpose.msra.mxu0 0.0
    %207 = vmatprep.subr.mxu0 0.0
    %208 = vmatpush1.xpose.msra.mxu0 0.0
    %209 = vmatprep.subr.mxu0 0.0
    %210 = vmatpush1.xpose.msra.mxu0 0.0
    %211 = vmatprep.subr.mxu0 0.0
    %212 = vmatpush1.xpose.msra.mxu0 0.0
    %213 = vmatprep.subr.mxu0 0.0
    %214 = vmatpush1.xpose.msra.mxu0 0.0
    %215 = vmatprep.subr.mxu0 0.0
    %216 = vmatpush1.xpose.msra.mxu0 0.0
    %217 = vmatprep.subr.mxu0 0.0
    %218 = vmatpush1.xpose.msra.mxu0 0.0
    %219 = vmatprep.subr.mxu0 0.0
    %220 = vmatpush1.xpose.msra.mxu0 0.0
    %221 = vmatprep.subr.mxu0 0.0
    %222 = vmatpush1.xpose.msra.mxu0 0.0
    %223 = vmatprep.subr.mxu0 0.0
    %224 = vmatpush1.xpose.msra.mxu0 0.0
    %225 = vmatprep.subr.mxu0 0.0
    %226 = vmatpush1.xpose.msra.mxu0 0.0
    %227 = vmatprep.subr.mxu0 0.0
    %228 = vmatpush1.xpose.msra.mxu0 0.0
    %229 = vmatprep.subr.mxu0 0.0
    %230 = vmatpush1.xpose.msra.mxu0 0.0
    %231 = vmatprep.subr.mxu0 0.0
    %232 = vmatpush1.xpose.msra.mxu0 0.0
    %233 = vmatprep.subr.mxu0 0.0
    %234 = vmatpush1.xpose.msra.mxu0 0.0
    %235 = vmatprep.subr.mxu0 0.0
    %236 = vmatpush1.xpose.msra.mxu0 %v203
    %237 = vmatprep.subr.mxu0 0.0
    %238 = vmatpush2.xpose.msra.mxu0 0.0
    %239 = vmatprep.subr.mxu0 0.0
    %240 = vmatpush2.xpose.msra.mxu0 0.0
    %241 = vmatprep.subr.mxu0 0.0
    %242 = vmatpush2.xpose.msra.mxu0 0.0
    %243 = vmatprep.subr.mxu0 0.0
    %244 = vmatpush2.xpose.msra.mxu0 0.0
    %245 = vmatprep.subr.mxu0 0.0
    %246 = vmatpush2.xpose.msra.mxu0 0.0
    %247 = vmatprep.subr.mxu0 0.0
    %248 = vmatpush2.xpose.msra.mxu0 0.0
    %249 = vmatprep.subr.mxu0 0.0
    %250 = vmatpush2.xpose.msra.mxu0 0.0
    %251 = vmatprep.subr.mxu0 0.0
    %252 = vmatpush2.xpose.msra.mxu0 0.0
    %253 = vmatprep.subr.mxu0 0.0
    %254 = vmatpush2.xpose.msra.mxu0 0.0
    %255 = vmatprep.subr.mxu0 0.0
    %256 = vmatpush2.xpose.msra.mxu0 0.0
    %257 = vmatprep.subr.mxu0 0.0
    %258 = vmatpush2.xpose.msra.mxu0 0.0
    %259 = vmatprep.subr.mxu0 0.0
    %260 = vmatpush2.xpose.msra.mxu0 0.0
    %261 = vmatprep.subr.mxu0 0.0
    %262 = vmatpush2.xpose.msra.mxu0 0.0
    %263 = vmatprep.subr.mxu0 0.0
    %264 = vmatpush2.xpose.msra.mxu0 0.0
    %265 = vmatprep.subr.mxu0 0.0
    %266 = vmatpush2.xpose.msra.mxu0 0.0
    %267 = vmatprep.subr.mxu0 0.0
    %268 = vmatpush2.xpose.msra.mxu0 0.0
    %269 = vmatprep.mubr.f32.mxu0 0.0
    %270 = vmatmul.mubr.f32.gmra.mxu0 %v200
    %v271 = vpop.f32.mrf.mxu0
    %v272 = vadd.f32 0.0, %v271
    %v273 = vpop.f32.mrf.mxu0
    %274 = vdwg.mxu0
    %v276 = vsel %vm44, %v198, 0
    %278 = vmatprep.subr.mxu0 0.0
    %279 = vmatpush1.xpose.msra.mxu0 0.0
    %280 = vmatprep.subr.mxu0 0.0
    %281 = vmatpush1.xpose.msra.mxu0 0.0
    %282 = vmatprep.subr.mxu0 0.0
    %283 = vmatpush1.xpose.msra.mxu0 0.0
    %284 = vmatprep.subr.mxu0 0.0
    %285 = vmatpush1.xpose.msra.mxu0 0.0
    %286 = vmatprep.subr.mxu0 0.0
    %287 = vmatpush1.xpose.msra.mxu0 0.0
    %288 = vmatprep.subr.mxu0 0.0
    %289 = vmatpush1.xpose.msra.mxu0 0.0
    %290 = vmatprep.subr.mxu0 0.0
    %291 = vmatpush1.xpose.msra.mxu0 0.0
    %292 = vmatprep.subr.mxu0 0.0
    %293 = vmatpush1.xpose.msra.mxu0 0.0
    %294 = vmatprep.subr.mxu0 0.0
    %295 = vmatpush1.xpose.msra.mxu0 0.0
    %296 = vmatprep.subr.mxu0 0.0
    %297 = vmatpush1.xpose.msra.mxu0 0.0
    %298 = vmatprep.subr.mxu0 0.0
    %299 = vmatpush1.xpose.msra.mxu0 0.0
    %300 = vmatprep.subr.mxu0 0.0
    %301 = vmatpush1.xpose.msra.mxu0 0.0
    %302 = vmatprep.subr.mxu0 0.0
    %303 = vmatpush1.xpose.msra.mxu0 0.0
    %304 = vmatprep.subr.mxu0 0.0
    %305 = vmatpush1.xpose.msra.mxu0 0.0
    %306 = vmatprep.subr.mxu0 0.0
    %307 = vmatpush1.xpose.msra.mxu0 0.0
    %308 = vmatprep.subr.mxu0 0.0
    %309 = vmatpush1.xpose.msra.mxu0 %v276
    %310 = vmatprep.subr.mxu0 0.0
    %311 = vmatpush2.xpose.msra.mxu0 0.0
    %312 = vmatprep.subr.mxu0 0.0
    %313 = vmatpush2.xpose.msra.mxu0 0.0
    %314 = vmatprep.subr.mxu0 0.0
    %315 = vmatpush2.xpose.msra.mxu0 0.0
    %316 = vmatprep.subr.mxu0 0.0
    %317 = vmatpush2.xpose.msra.mxu0 0.0
    %318 = vmatprep.subr.mxu0 0.0
    %319 = vmatpush2.xpose.msra.mxu0 0.0
    %320 = vmatprep.subr.mxu0 0.0
    %321 = vmatpush2.xpose.msra.mxu0 0.0
    %322 = vmatprep.subr.mxu0 0.0
    %323 = vmatpush2.xpose.msra.mxu0 0.0
    %324 = vmatprep.subr.mxu0 0.0
    %325 = vmatpush2.xpose.msra.mxu0 0.0
    %326 = vmatprep.subr.mxu0 0.0
    %327 = vmatpush2.xpose.msra.mxu0 0.0
    %328 = vmatprep.subr.mxu0 0.0
    %329 = vmatpush2.xpose.msra.mxu0 0.0
    %330 = vmatprep.subr.mxu0 0.0
    %331 = vmatpush2.xpose.msra.mxu0 0.0
    %332 = vmatprep.subr.mxu0 0.0
    %333 = vmatpush2.xpose.msra.mxu0 0.0
    %334 = vmatprep.subr.mxu0 0.0
    %335 = vmatpush2.xpose.msra.mxu0 0.0
    %336 = vmatprep.subr.mxu0 0.0
    %337 = vmatpush2.xpose.msra.mxu0 0.0
    %338 = vmatprep.subr.mxu0 0.0
    %339 = vmatpush2.xpose.msra.mxu0 0.0
    %340 = vmatprep.subr.mxu0 0.0
    %341 = vmatpush2.xpose.msra.mxu0 0.0
    %342 = vmatprep.mubr.f32.mxu0 0.0
    %343 = vmatmul.mubr.f32.gmra.mxu0 %v200
    %v344 = vpop.f32.mrf.mxu0
    %v345 = vadd.f32 0.0, %v344
    %v346 = vpop.f32.mrf.mxu0
    %347 = vdwg.mxu0
    %v348 = vmul.f32 %v40, %v40
    %v349 = vmul.f32 %v41, %v41
    %vm350 = vcmask 253952
    %v351 = vsel %vm350, %v348, 0.0
    %352 = vadd.xlane.f32.xlu0 %v351
    %v353 = vpop.xlane.xlu0 %352
    %v354 = vsel %vm350, %v349, 0.0
    %355 = vadd.xlane.f32.xlu0 %v354
    %v356 = vpop.xlane.xlu0 %355
    %v357 = vmul.f32 %v118, 2.0
    %v358 = vmul.f32 %v194, 2.0
    %v359 = vsub.f32 %v353, %v357
    %v360 = vsub.f32 %v356, %v358
    %v361 = vadd.f32 %v359, %v272
    %v362 = vadd.f32 %v360, %v345
    %v363 = vmax.f32 %v361, 0.0
    %v364 = vmax.f32 %v362, 0.0
    %v365 = vrsqrt.pop %v363
    %v366 = vmul.f32 %v363, %v365
    %vm367 = vcmp.eq.f32.partialorder %v363, inf
    %v368 = vsel %vm367, %v363, %v366
    %vm369 = vcmp.eq.f32.partialorder %v363, 0.0
    %v370 = vand.u32 %v363, 2147483648
    %v371 = vsel %vm369, %v370, %v368
    %v372 = vrsqrt.pop %v364
    %v373 = vmul.f32 %v364, %v372
    %vm374 = vcmp.eq.f32.partialorder %v364, inf
    %v375 = vsel %vm374, %v364, %v373
    %vm376 = vcmp.eq.f32.partialorder %v364, 0.0
    %v377 = vand.u32 %v364, 2147483648
    %v378 = vsel %vm376, %v377, %v375
    %v379 = vsub.f32 6.0, %v371
    %v380 = vsub.f32 6.0, %v378
    %vm381 = vcmask 24576
    %382 = vst.msk [vmem:[#allocation7] sm:$0x1] %vm381, %v379
    %383 = vst.msk [vmem:[#allocation7 + $0x1] sm:$0x1] %vm381, %v380
    // Predicated region
    $region18: #{tpu_custom_call.1} parent=1 // pred_check
      _
    $region19: #{tpu_custom_call.1} parent=1 // pred_check_branch
      %385 = sbr.rel (0) target = $region21
    $region20: #{tpu_custom_call.1} parent=1 // pred_region
      %s387 = ssub.s32 32, 32
      %388 = vsyncadd [#allocation4], %s387
      %s389 = sshll.u32 [#allocation7], 4
      %s390 = int_to_ptr.vmem [resolvable:$true] %s389
      %395 = dma.vmem_to_hbm [thread:$0]  %s390, 32, %s2, [#allocation4], 16, 16, 1
    $region21: #{tpu_custom_call.1} parent=1 // pred_fallthru
      _
    // Predicated region
    $region22: #{tpu_custom_call.1} parent=1 // pred_check
      _
    $region23: #{tpu_custom_call.1} parent=1 // pred_check_branch
      %397 = sbr.rel (0) target = $region25
    $region24: #{tpu_custom_call.1} parent=1 // pred_region
      %398 = dma.done [#allocation4], 32
    $region25: #{tpu_custom_call.1} parent=1 // pred_fallthru
      _
    %399 = vsyncpa [#allocation3], 1
    %400 = vsyncpa [#allocation6], 1
    %401 = vsyncpa [#allocation4], 1

</llo_original>
